<compile_context>
chip_gen: v6e
topology: v6e:2x2x1
jax: 0.10.0
libtpu: 0.0.40
codegen_flags: <defaults>
</compile_context>

<pallas_src>
import jax
import jax.numpy as jnp
from jax.experimental import pallas as pl
from jax.experimental.pallas import tpu as pltpu


def attention2_kernel(x_ref, w1_ref, b1_ref, w2_ref, a_ref):
    # x_ref : (N, L) bf16     w1_ref: (L, D) bf16
    # b1_ref: (1, D) f32      w2_ref: (1, D) f32 (lane-dense Linear(D,1) weight)
    # a_ref : (N, 1) f32      softmax-normalized attention column for this bag
    h = jnp.dot(x_ref[...], w1_ref[...],
                preferred_element_type=jnp.float32)              # (N, D)  MXU, f32 acc
    h = jnp.tanh(h + b1_ref[...])                                # f32 VPU/EUP

    # Linear(D, K=1) on the VPU: an MXU matmul with a single output column
    # would waste >99% of the systolic array.  Its bias is a constant shift of
    # every instance logit, a no-op under the softmax below, so it is dropped.
    logits = jnp.sum(h * w2_ref[...], axis=-1, keepdims=True)    # (N, 1)

    # softmax over instances == PyTorch softmax(A.transpose(1, 0), dim=1).
    # Exact divide keeps sum(attention) == 1 to f32 precision (the approx
    # EUP reciprocal left a ~1e-3 normalization error).
    m = jnp.max(logits, axis=0, keepdims=True)
    e = jnp.exp(logits - m)
    denom = jnp.sum(e, axis=0, keepdims=True)
    a_ref[...] = e / denom                                       # (N, 1)


def attention2_batched(x, params):
    """x: (B, N, L) float32 -> attention weights (B, K=1, N), softmax over N."""
    B, N, L = x.shape
    D = params["w1"].shape[1]
    assert params["w2"].shape[0] == 1, "kernel implements the module default K=1"

    # Narrow only the matmul operands (bf16 in, f32 accumulate).
    x_bf16 = x.astype(jnp.bfloat16)
    w1_bf16 = params["w1"].astype(jnp.bfloat16)
    b1 = params["b1"].astype(jnp.float32)                     # (1, D)
    w2_row = params["w2"].reshape(1, D).astype(jnp.float32)   # lane-dense (1, D)

    out = pl.pallas_call(
        attention2_kernel,
        grid=(B,),
        in_specs=[
            pl.BlockSpec((None, N, L), lambda b: (b, 0, 0)),  # per-bag x tile
            pl.BlockSpec((L, D), lambda b: (0, 0)),           # weights stay
            pl.BlockSpec((1, D), lambda b: (0, 0)),           #  VMEM-resident
            pl.BlockSpec((1, D), lambda b: (0, 0)),           #  across all bags
        ],
        out_specs=pl.BlockSpec((None, N, 1), lambda b: (b, 0, 0)),
        out_shape=jax.ShapeDtypeStruct((B, N, 1), jnp.float32),
        compiler_params=pltpu.CompilerParams(
            dimension_semantics=("parallel",)),
    )(x_bf16, w1_bf16, b1, w2_row)

    # (B, N, 1) -> (B, 1, N): swapping a size-1 axis is free layout plumbing.
    return jnp.swapaxes(out, -1, -2)


def attention2(x, params):
    """Single-bag API matching the PyTorch module: (N, L) -> (K, N)."""
    # Note: implements the default isNorm=True path of Attention2.forward.
    return attention2_batched(x[None], params)[0]


def init_params(key, L=512, D=128, K=1):
    """Deterministic synthetic parameters (same shapes as the PyTorch module)."""
    ks = jax.random.split(key, 4)
    s_L = 1.0 / jnp.sqrt(L)
    s_D = 1.0 / jnp.sqrt(D)
    return {
        # attention[0]: Linear(L, D), stored pre-transposed as (in, out)
        "w1": jax.random.normal(ks[0], (L, D), jnp.float32) * s_L,
        "b1": jax.random.normal(ks[1], (1, D), jnp.float32) * s_L,
        # attention[2]: Linear(D, K) in PyTorch-native (out, in) = (K, D) layout
        "w2": jax.random.normal(ks[2], (K, D), jnp.float32) * s_D,
        "b2": jax.random.normal(ks[3], (1, K), jnp.float32) * s_D,
    }


def reference_forward(x, p):
    """Plain-JAX (f32) reference of the PyTorch forward."""
    A = jnp.tanh(x @ p["w1"] + p["b1"])        # (N, D)
    A = A @ p["w2"].T + p["b2"]                # (N, K)
    A = A.T                                    # (K, N)
    return jax.nn.softmax(A, axis=1)


if __name__ == "__main__":
    # Module defaults L=512, D=128, K=1; small bag/instance counts for the test.
    B, N, L, D, K = 4, 16, 512, 128, 1

    key = jax.random.PRNGKey(0)
    k_x, k_p = jax.random.split(key)
    x = jax.random.normal(k_x, (B, N, L), jnp.float32)
    params = init_params(k_p, L=L, D=D, K=K)

    out = attention2_batched(x, params)
    out = jax.block_until_ready(out)
    assert out.shape == (B, K, N)

    # Semantic check vs the pure-f32 reference.  Tolerance reflects the bf16
    # matmul operands, not kernel math errors.
    ref = jax.vmap(lambda xb: reference_forward(xb, params))(x)
    assert jnp.allclose(out, ref, atol=1e-2, rtol=1e-2), (out, ref)

    # Tighter numeric check: same computation with the same bf16-rounded
    # matmul operands isolates operand rounding from the kernel itself.
    x_r = x.astype(jnp.bfloat16).astype(jnp.float32)
    p_r = dict(params, w1=params["w1"].astype(jnp.bfloat16).astype(jnp.float32))
    ref_tight = jax.vmap(lambda xb: reference_forward(xb, p_r))(x_r)
    assert jnp.allclose(out, ref_tight, atol=5e-3, rtol=5e-3), (out, ref_tight)

    # Attention weights must sum to 1 over the instance axis (exact divide now).
    assert jnp.allclose(out.sum(axis=-1), 1.0, atol=1e-3)

    # Single-bag API matching the module's (N, L) -> (K, N) signature.
    a1 = attention2(x[0], params)
    a1 = jax.block_until_ready(a1)
    assert a1.shape == (K, N)

    print("KERNEL_OK")
</pallas_src>

<mosaic_0001>
module attributes {stable_mosaic.version = 11 : i64} {
  func.func @attention2_kernel(%arg0: i32, %arg1: memref<1x16x512xbf16, #tpu.memory_space<vmem>>, %arg2: memref<512x128xbf16, #tpu.memory_space<vmem>>, %arg3: memref<1x128xf32, #tpu.memory_space<vmem>>, %arg4: memref<1x128xf32, #tpu.memory_space<vmem>>, %arg5: memref<1x16x1xf32, #tpu.memory_space<vmem>>) attributes {dimension_semantics = [#tpu.dimension_semantics<parallel>], iteration_bounds = array<i64: 4>, scalar_prefetch = 0 : i64, scratch_operands = 0 : i64, tpu.core_type = #tpu.core_type<tc>, window_params = [{transform_indices = @transform_0, window_bounds = array<i64: 1, 16, 512>}, {pipeline_mode = #tpu.pipeline_mode<synchronous>, transform_indices = @transform_1, window_bounds = array<i64: 512, 128>}, {pipeline_mode = #tpu.pipeline_mode<synchronous>, transform_indices = @transform_2, window_bounds = array<i64: 1, 128>}, {pipeline_mode = #tpu.pipeline_mode<synchronous>, transform_indices = @transform_3, window_bounds = array<i64: 1, 128>}, {transform_indices = @transform_4, window_bounds = array<i64: 1, 16, 1>}]} {
    %c0 = arith.constant 0 : index
    %c0_0 = arith.constant 0 : index
    %c0_1 = arith.constant 0 : index
    %0 = vector.load %arg1[%c0, %c0_0, %c0_1] : memref<1x16x512xbf16, #tpu.memory_space<vmem>>, vector<1x16x512xbf16>
    %1 = vector.shape_cast %0 : vector<1x16x512xbf16> to vector<16x512xbf16>
    %c0_2 = arith.constant 0 : index
    %c0_3 = arith.constant 0 : index
    %2 = vector.load %arg2[%c0_2, %c0_3] : memref<512x128xbf16, #tpu.memory_space<vmem>>, vector<512x128xbf16>
    %cst = arith.constant dense<0.000000e+00> : vector<16x128xf32>
    %3 = tpu.matmul %1, %2, %cst {dimension_numbers = #tpu.dot_dimension_numbers<[1], [0], [0], [1], [0, 0, 1, 1], [], []>} : vector<16x512xbf16>, vector<512x128xbf16>, vector<16x128xf32> -> vector<16x128xf32>
    %c0_4 = arith.constant 0 : index
    %c0_5 = arith.constant 0 : index
    %4 = vector.load %arg3[%c0_4, %c0_5] : memref<1x128xf32, #tpu.memory_space<vmem>>, vector<1x128xf32>
    %5 = vector.broadcast %4 : vector<1x128xf32> to vector<16x128xf32>
    %6 = arith.addf %3, %5 : vector<16x128xf32>
    %7 = math.tanh %6 : vector<16x128xf32>
    %c0_6 = arith.constant 0 : index
    %c0_7 = arith.constant 0 : index
    %8 = vector.load %arg4[%c0_6, %c0_7] : memref<1x128xf32, #tpu.memory_space<vmem>>, vector<1x128xf32>
    %9 = vector.broadcast %8 : vector<1x128xf32> to vector<16x128xf32>
    %10 = arith.mulf %7, %9 : vector<16x128xf32>
    %cst_8 = arith.constant dense<0.000000e+00> : vector<16xf32>
    %11 = vector.multi_reduction <add>, %10, %cst_8 [1] : vector<16x128xf32> to vector<16xf32>
    %12 = vector.shape_cast %11 : vector<16xf32> to vector<16x1xf32>
    %cst_9 = arith.constant dense<0xFF800000> : vector<1xf32>
    %13 = vector.multi_reduction <maximumf>, %12, %cst_9 [0] : vector<16x1xf32> to vector<1xf32>
    %14 = vector.shape_cast %13 : vector<1xf32> to vector<1x1xf32>
    %15 = vector.broadcast %14 : vector<1x1xf32> to vector<16x1xf32>
    %16 = arith.subf %12, %15 : vector<16x1xf32>
    %17 = math.exp %16 : vector<16x1xf32>
    %cst_10 = arith.constant dense<0.000000e+00> : vector<1xf32>
    %18 = vector.multi_reduction <add>, %17, %cst_10 [0] : vector<16x1xf32> to vector<1xf32>
    %19 = vector.shape_cast %18 : vector<1xf32> to vector<1x1xf32>
    %20 = vector.broadcast %19 : vector<1x1xf32> to vector<16x1xf32>
    %21 = arith.divf %17, %20 : vector<16x1xf32>
    %c0_11 = arith.constant 0 : index
    %c0_12 = arith.constant 0 : index
    %c0_13 = arith.constant 0 : index
    %22 = vector.load %arg5[%c0_11, %c0_12, %c0_13] : memref<1x16x1xf32, #tpu.memory_space<vmem>>, vector<1x16x1xf32>
    %23 = vector.shape_cast %22 : vector<1x16x1xf32> to vector<16x1xf32>
    %24 = vector.shape_cast %21 : vector<16x1xf32> to vector<1x16x1xf32>
    tpu.vector_store %arg5[%c0_11, %c0_12, %c0_13], %24 {strides = array<i32>} : memref<1x16x1xf32, #tpu.memory_space<vmem>>, vector<1x16x1xf32>,
    return
  }
  func.func @transform_0(%arg0: i32) -> (i32, i32, i32) {
    %c0_i32 = arith.constant 0 : i32
    %c0_i32_0 = arith.constant 0 : i32
    %c0_i32_1 = arith.constant 0 : i32
    return %arg0, %c0_i32, %c0_i32_0 : i32, i32, i32
  }
  func.func @transform_1(%arg0: i32) -> (i32, i32) {
    %c0_i32 = arith.constant 0 : i32
    %c0_i32_0 = arith.constant 0 : i32
    %c0_i32_1 = arith.constant 0 : i32
    return %c0_i32, %c0_i32_0 : i32, i32
  }
  func.func @transform_2(%arg0: i32) -> (i32, i32) {
    %c0_i32 = arith.constant 0 : i32
    %c0_i32_0 = arith.constant 0 : i32
    %c0_i32_1 = arith.constant 0 : i32
    return %c0_i32, %c0_i32_0 : i32, i32
  }
  func.func @transform_3(%arg0: i32) -> (i32, i32) {
    %c0_i32 = arith.constant 0 : i32
    %c0_i32_0 = arith.constant 0 : i32
    %c0_i32_1 = arith.constant 0 : i32
    return %c0_i32, %c0_i32_0 : i32, i32
  }
  func.func @transform_4(%arg0: i32) -> (i32, i32, i32) {
    %c0_i32 = arith.constant 0 : i32
    %c0_i32_0 = arith.constant 0 : i32
    %c0_i32_1 = arith.constant 0 : i32
    return %arg0, %c0_i32, %c0_i32_0 : i32, i32, i32
  }
}

</mosaic_0001>

<llo_original>
// kernel: tpu_custom_call.1
$region0: #{tpu_custom_call.1}
  #allocation0 [shape = 'u32[]', space=smem, size = 0x4, offset = 0x4, fixed_abs, tag = 'smem constant byte address 0x4 - core index']
  #allocation1 [shape = 'u32[144,128]{1,0:T(1,128)}', space=vmem, size = 0x12000, scoped, tag = 'internal scratch']
  %s0 = inlined_call_operand.hbm [shape: bf16[4,16,512], index: 0, kind: input, shape index: {}]
  %s1 = inlined_call_operand.hbm [shape: bf16[512,128], index: 1, kind: input, shape index: {}]
  %s2 = inlined_call_operand.vmem [shape: f32[1,128], index: 2, kind: input, shape index: {}]
  %s3 = inlined_call_operand.vmem [shape: f32[1,128], index: 3, kind: input, shape index: {}]
  %s4 = inlined_call_operand.vmem [shape: f32[4,16,1], index: 4, kind: output, shape index: {}]
  %s5 = sld [smem:[#allocation0]]
  $region57: #{tpu_custom_call.1} parent=0
    _
  %s7 = ssub.s32 1, %s5
  %s8 = scalar_select 0, %s7, %s5
  $region1: #{tpu_custom_call.1} parent=0
    #allocation2 [shape = 'u8[32768]{0}', space=vmem, size = 0x8000, scoped, tag = 'input window, operand 0']
    #allocation3 [shape = 's32[2]{0}', space=sflag, size = 0x8, scoped, tag = 'scoped memory for tpu_custom_call.1']
    #allocation4 [shape = 'u8[131072]{0}', space=vmem, size = 0x20000, scoped, tag = 'input window, operand 1, single buffered']
    #allocation5 [shape = 's32[1]{0}', space=sflag, size = 0x4, scoped, tag = 'scoped memory for tpu_custom_call.1']
    %9 = vsyncpa [#allocation3], 0
    %s10 = scalar_lea.sflag [#allocation3], 1
    %11 = vsyncpa %s10, 0
    %12 = vsyncpa [#allocation5], 0
    loop: start=0, step=1, limit=6
    $region2: #{tpu_custom_call.1} parent=1 // loop_pre_header
      _
    $region3: #{tpu_custom_call.1} parent=1 // loop_header
      %s14 = sphi 0, %s18
      %p15 = scmp.ge.s32.totalorder %s14, 6
      %s24 = sphi 0, %s26
      %s27 = sphi 0, %s24
      %s28 = sphi 0, %s27
      %s44 = sphi 0, %s28
      %s48 = sphi 0, %s48
      %s50 = sphi 0, %s48
      %s51 = sphi 0, %s50
      %s65 = sphi 0, %s51
      %s69 = sphi 0, %s69
      %s71 = sphi 0, %s69
      %s72 = sphi 0, %s71
      %s86 = sphi 0, %s72
      %s90 = sphi 0, %s90
      %s92 = sphi 0, %s90
      %s93 = sphi 0, %s92
      %s107 = sphi 0, %s93
      %s113 = sphi 0, %s115
      %s116 = sphi 0, %s113
      %s117 = sphi 0, %s116
      %s133 = sphi 0, %s117
    $region4: #{tpu_custom_call.1} parent=1 // loop_header_branch
      %17 = sbr.rel (%p15) target = $region8
    $region5: #{tpu_custom_call.1} parent=1 // loop_body
      %s19 = ssub.s32 %s14, 1
      %s20 = ssub.s32 %s14, 2
      %s21 = sadd.s32 %s14, 1
      %s22 = ssub.s32 %s14, %s21
      %p23 = scmp.eq.s32.totalorder %s22, 0
      %s25 = sadd.s32 %s24, 1
      %s26 = scalar_select %p23, %s24, %s25
      %p29 = pneg %p23
      %p30 = scmp.eq.s32.totalorder %s14, 3
      %p31 = por %p29, %p30
      %p32 = scmp.ne.s32.totalorder %s24, %s27
      %p33 = scmp.eq.s32.totalorder %s14, 0
      %p34 = por %p32, %p33
      %p35 = scmp.ne.s32.totalorder %s24, %s27
      %p36 = scmp.eq.s32.totalorder %s19, 3
      %p37 = por %p35, %p36
      %p38 = scmp.ne.s32.totalorder %s27, %s28
      %p39 = scmp.eq.s32.totalorder %s19, 0
      %p40 = por %p38, %p39
      %p41 = scmp.ne.s32.totalorder %s27, %s28
      %p42 = scmp.eq.s32.totalorder %s20, 3
      %p43 = por %p41, %p42
      %p45 = scmp.ne.s32.totalorder %s28, %s44
      %p46 = scmp.eq.s32.totalorder %s20, 0
      %p47 = por %p45, %p46
      %s49 = sadd.s32 %s48, 1
      %p52 = scmp.eq.s32.totalorder %s14, 3
      %p53 = scmp.ne.s32.totalorder %s48, %s50
      %p54 = scmp.eq.s32.totalorder %s14, 0
      %p55 = por %p53, %p54
      %p56 = scmp.ne.s32.totalorder %s48, %s50
      %p57 = scmp.eq.s32.totalorder %s19, 3
      %p58 = por %p56, %p57
      %p59 = scmp.ne.s32.totalorder %s50, %s51
      %p60 = scmp.eq.s32.totalorder %s19, 0
      %p61 = por %p59, %p60
      %p62 = scmp.ne.s32.totalorder %s50, %s51
      %p63 = scmp.eq.s32.totalorder %s20, 3
      %p64 = por %p62, %p63
      %p66 = scmp.ne.s32.totalorder %s51, %s65
      %p67 = scmp.eq.s32.totalorder %s20, 0
      %p68 = por %p66, %p67
      %s70 = sadd.s32 %s69, 1
      %p73 = scmp.eq.s32.totalorder %s14, 3
      %p74 = scmp.ne.s32.totalorder %s69, %s71
      %p75 = scmp.eq.s32.totalorder %s14, 0
      %p76 = por %p74, %p75
      %p77 = scmp.ne.s32.totalorder %s69, %s71
      %p78 = scmp.eq.s32.totalorder %s19, 3
      %p79 = por %p77, %p78
      %p80 = scmp.ne.s32.totalorder %s71, %s72
      %p81 = scmp.eq.s32.totalorder %s19, 0
      %p82 = por %p80, %p81
      %p83 = scmp.ne.s32.totalorder %s71, %s72
      %p84 = scmp.eq.s32.totalorder %s20, 3
      %p85 = por %p83, %p84
      %p87 = scmp.ne.s32.totalorder %s72, %s86
      %p88 = scmp.eq.s32.totalorder %s20, 0
      %p89 = por %p87, %p88
      %s91 = sadd.s32 %s90, 1
      %p94 = scmp.eq.s32.totalorder %s14, 3
      %p95 = scmp.ne.s32.totalorder %s90, %s92
      %p96 = scmp.eq.s32.totalorder %s14, 0
      %p97 = por %p95, %p96
      %p98 = scmp.ne.s32.totalorder %s90, %s92
      %p99 = scmp.eq.s32.totalorder %s19, 3
      %p100 = por %p98, %p99
      %p101 = scmp.ne.s32.totalorder %s92, %s93
      %p102 = scmp.eq.s32.totalorder %s19, 0
      %p103 = por %p101, %p102
      %p104 = scmp.ne.s32.totalorder %s92, %s93
      %p105 = scmp.eq.s32.totalorder %s20, 3
      %p106 = por %p104, %p105
      %p108 = scmp.ne.s32.totalorder %s93, %s107
      %p109 = scmp.eq.s32.totalorder %s20, 0
      %p110 = por %p108, %p109
      %s111 = ssub.s32 %s14, %s21
      %p112 = scmp.eq.s32.totalorder %s111, 0
      %s114 = sadd.s32 %s113, 1
      %s115 = scalar_select %p112, %s113, %s114
      %p118 = pneg %p112
      %p119 = scmp.eq.s32.totalorder %s14, 3
      %p120 = por %p118, %p119
      %p121 = scmp.ne.s32.totalorder %s113, %s116
      %p122 = scmp.eq.s32.totalorder %s14, 0
      %p123 = por %p121, %p122
      %p124 = scmp.ne.s32.totalorder %s113, %s116
      %p125 = scmp.eq.s32.totalorder %s19, 3
      %p126 = por %p124, %p125
      %p127 = scmp.ne.s32.totalorder %s116, %s117
      %p128 = scmp.eq.s32.totalorder %s19, 0
      %p129 = por %p127, %p128
      %p130 = scmp.ne.s32.totalorder %s116, %s117
      %p131 = scmp.eq.s32.totalorder %s20, 3
      %p132 = por %p130, %p131
      %p134 = scmp.ne.s32.totalorder %s117, %s133
      %p135 = scmp.eq.s32.totalorder %s20, 0
      %p136 = por %p134, %p135
      %p137 = scmp.le.s32.totalorder 1, %s14
      %p138 = scmp.lt.s32.totalorder %s14, 5
      %p139 = pnand %p137, %p138
      %p140 = pneg %p139
      // Predicated region
      $region9: #{tpu_custom_call.1} parent=5 // pred_check
        _
      $region10: #{tpu_custom_call.1} parent=5 // pred_check_branch
        %142 = sbr.rel (%p139) target = $region12
      $region11: #{tpu_custom_call.1} parent=5 // pred_region
        %s143 = ssub.s32 %s14, 1
        // Predicated region
        $region13: #{tpu_custom_call.1} parent=11 // pred_check
          %p144 = pneg %p61
        $region14: #{tpu_custom_call.1} parent=11 // pred_check_branch
          %146 = sbr.rel (%p144) target = $region16
        $region15: #{tpu_custom_call.1} parent=11 // pred_region
          %s148 = ssub.s32 4096, 4096
          %149 = vsyncadd [#allocation5], %s148
          %s150 = sshll.u32 [#allocation4], 4
          %s151 = int_to_ptr.vmem [resolvable:$true] %s150
          %156 = dma.hbm_to_vmem [thread:$0]  %s1, 4096, %s151, [#allocation5], 64, 64, 4
        $region16: #{tpu_custom_call.1} parent=11 // pred_fallthru
          _
        // Predicated region
        $region17: #{tpu_custom_call.1} parent=11 // pred_check
          %p157 = pneg %p82
        $region18: #{tpu_custom_call.1} parent=11 // pred_check_branch
          %159 = sbr.rel (%p157) target = $region20
        $region19: #{tpu_custom_call.1} parent=11 // pred_region
          _
        $region20: #{tpu_custom_call.1} parent=11 // pred_fallthru
          _
        // Predicated region
        $region21: #{tpu_custom_call.1} parent=11 // pred_check
          %p160 = pneg %p103
        $region22: #{tpu_custom_call.1} parent=11 // pred_check_branch
          %162 = sbr.rel (%p160) target = $region24
        $region23: #{tpu_custom_call.1} parent=11 // pred_region
          _
        $region24: #{tpu_custom_call.1} parent=11 // pred_fallthru
          _
      $region12: #{tpu_custom_call.1} parent=5 // pred_fallthru
        _
      %p163 = scmp.lt.s32.totalorder %s14, 4
      // Predicated region
      $region25: #{tpu_custom_call.1} parent=5 // pred_check
        %p164 = pneg %p163
      $region26: #{tpu_custom_call.1} parent=5 // pred_check_branch
        %166 = sbr.rel (%p164) target = $region28
      $region27: #{tpu_custom_call.1} parent=5 // pred_region
        // Predicated region
        $region29: #{tpu_custom_call.1} parent=27 // pred_check
          %p167 = pneg %p34
        $region30: #{tpu_custom_call.1} parent=27 // pred_check_branch
          %169 = sbr.rel (%p167) target = $region32
        $region31: #{tpu_custom_call.1} parent=27 // pred_region
          %s170 = sand.u32 %s24, 1
          %s171 = scalar_lea.sflag [#allocation3], %s170
          %s172 = sand.u32 %s24, 1
          %s173 = smul.addr %s172, 32
          %s174 = scalar_lea.vmem [#allocation2], %s173
          %s176 = ssub.s32 512, 512
          %177 = vsyncadd %s171, %s176
          %s178 = smul.addr %s14, 8
          %s179 = smul.addr %s178, 64
          %s180 = scalar_lea.hbm %s0, %s179
          %s181 = sshll.u32 %s174, 4
          %s182 = int_to_ptr.vmem [resolvable:$true] %s181
          %187 = dma.hbm_to_vmem [thread:$0]  %s180, 512, %s182, %s171, 256, 256, 16
        $region32: #{tpu_custom_call.1} parent=27 // pred_fallthru
          _
      $region28: #{tpu_custom_call.1} parent=5 // pred_fallthru
        _
      %p188 = scmp.le.s32.totalorder 1, %s14
      %p189 = scmp.lt.s32.totalorder %s14, 5
      %p190 = pnand %p188, %p189
      %p191 = pneg %p190
      // Predicated region
      $region33: #{tpu_custom_call.1} parent=5 // pred_check
        _
      $region34: #{tpu_custom_call.1} parent=5 // pred_check_branch
        %193 = sbr.rel (%p190) target = $region36
      $region35: #{tpu_custom_call.1} parent=5 // pred_region
        %s194 = ssub.s32 %s14, 1
        %s195 = sand.u32 %s27, 1
        %s196 = scalar_lea.sflag [#allocation3], %s195
        %s197 = sand.u32 %s27, 1
        %s198 = smul.addr %s197, 32
        %s199 = scalar_lea.vmem [#allocation2], %s198
        // Predicated region
        $region37: #{tpu_custom_call.1} parent=35 // pred_check
          %p200 = pneg %p40
        $region38: #{tpu_custom_call.1} parent=35 // pred_check_branch
          %202 = sbr.rel (%p200) target = $region40
        $region39: #{tpu_custom_call.1} parent=35 // pred_region
          %203 = dma.done %s196, 512
        $region40: #{tpu_custom_call.1} parent=35 // pred_fallthru
          _
        // Predicated region
        $region41: #{tpu_custom_call.1} parent=35 // pred_check
          %p204 = pneg %p61
        $region42: #{tpu_custom_call.1} parent=35 // pred_check_branch
          %206 = sbr.rel (%p204) target = $region44
        $region43: #{tpu_custom_call.1} parent=35 // pred_region
          %207 = dma.done [#allocation5], 4096
        $region44: #{tpu_custom_call.1} parent=35 // pred_fallthru
          _
        %s208 = sand.u32 %s27, 1
        %s209 = scalar_lea.sflag [#allocation3], %s208
        %s210 = sand.u32 %s27, 1
        %s211 = smul.addr %s210, 32
        %s212 = scalar_lea.vmem [#allocation2], %s211
        %p213 = pneg %p40
        %p214 = pneg %p37
        %p215 = pneg %p61
        %p216 = pneg %p58
        %p217 = pneg %p82
        %p218 = pneg %p79
        %p219 = pneg %p103
        %p220 = pneg %p100
        %p221 = pneg %p129
        %p222 = pneg %p126
        %p223 = scmp.lt.s32.totalorder %s19, 3
        %s224 = scalar_select %p223, %s19, 3
        %s225 = smul.addr %s224, 2
        %s226 = smul.addr %s225, 8
        %s227 = scalar_lea.vmem %s4, %s226
        %p228 = scmp.lt.s32.totalorder %s19, 3
        %s229 = scalar_select %p228, %s19, 3
        %s230 = smul.addr %s229, 2
        %s231 = smul.addr %s230, 8
        %s232 = scalar_lea.vmem %s4, %s231
        %v234 = vld [vmem:[%s199] sm:$0xff]
        %v235 = vld [vmem:[%s199 + $0x8] sm:$0xff]
        %v236 = vld [vmem:[%s199 + $0x10] sm:$0xff]
        %v237 = vld [vmem:[%s199 + $0x18] sm:$0xff]
        %v238 = vld [vmem:[#allocation4] sm:$0xf]
        %v239 = vld [vmem:[#allocation4 + $0x4] sm:$0xf]
        %v240 = vld [vmem:[#allocation4 + $0x8] sm:$0xf]
        %v241 = vld [vmem:[#allocation4 + $0xc] sm:$0xf]
        %v242 = vld [vmem:[#allocation4 + $0x10] sm:$0xf]
        %v243 = vld [vmem:[#allocation4 + $0x14] sm:$0xf]
        %v244 = vld [vmem:[#allocation4 + $0x18] sm:$0xf]
        %v245 = vld [vmem:[#allocation4 + $0x1c] sm:$0xf]
        %v246 = vld [vmem:[#allocation4 + $0x20] sm:$0xf]
        %v247 = vld [vmem:[#allocation4 + $0x24] sm:$0xf]
        %v248 = vld [vmem:[#allocation4 + $0x28] sm:$0xf]
        %v249 = vld [vmem:[#allocation4 + $0x2c] sm:$0xf]
        %v250 = vld [vmem:[#allocation4 + $0x30] sm:$0xf]
        %v251 = vld [vmem:[#allocation4 + $0x34] sm:$0xf]
        %v252 = vld [vmem:[#allocation4 + $0x38] sm:$0xf]
        %v253 = vld [vmem:[#allocation4 + $0x3c] sm:$0xf]
        %v254 = vld [vmem:[#allocation4 + $0x40] sm:$0xf]
        %v255 = vld [vmem:[#allocation4 + $0x44] sm:$0xf]
        %v256 = vld [vmem:[#allocation4 + $0x48] sm:$0xf]
        %v257 = vld [vmem:[#allocation4 + $0x4c] sm:$0xf]
        %v258 = vld [vmem:[#allocation4 + $0x50] sm:$0xf]
        %v259 = vld [vmem:[#allocation4 + $0x54] sm:$0xf]
        %v260 = vld [vmem:[#allocation4 + $0x58] sm:$0xf]
        %v261 = vld [vmem:[#allocation4 + $0x5c] sm:$0xf]
        %v262 = vld [vmem:[#allocation4 + $0x60] sm:$0xf]
        %v263 = vld [vmem:[#allocation4 + $0x64] sm:$0xf]
        %v264 = vld [vmem:[#allocation4 + $0x68] sm:$0xf]
        %v265 = vld [vmem:[#allocation4 + $0x6c] sm:$0xf]
        %v266 = vld [vmem:[#allocation4 + $0x70] sm:$0xf]
        %v267 = vld [vmem:[#allocation4 + $0x74] sm:$0xf]
        %v268 = vld [vmem:[#allocation4 + $0x78] sm:$0xf]
        %v269 = vld [vmem:[#allocation4 + $0x7c] sm:$0xf]
        %v270 = vld [vmem:[#allocation4 + $0x80] sm:$0xf]
        %v271 = vld [vmem:[#allocation4 + $0x84] sm:$0xf]
        %v272 = vld [vmem:[#allocation4 + $0x88] sm:$0xf]
        %v273 = vld [vmem:[#allocation4 + $0x8c] sm:$0xf]
        %v274 = vld [vmem:[#allocation4 + $0x90] sm:$0xf]
        %v275 = vld [vmem:[#allocation4 + $0x94] sm:$0xf]
        %v276 = vld [vmem:[#allocation4 + $0x98] sm:$0xf]
        %v277 = vld [vmem:[#allocation4 + $0x9c] sm:$0xf]
        %v278 = vld [vmem:[#allocation4 + $0xa0] sm:$0xf]
        %v279 = vld [vmem:[#allocation4 + $0xa4] sm:$0xf]
        %v280 = vld [vmem:[#allocation4 + $0xa8] sm:$0xf]
        %v281 = vld [vmem:[#allocation4 + $0xac] sm:$0xf]
        %v282 = vld [vmem:[#allocation4 + $0xb0] sm:$0xf]
        %v283 = vld [vmem:[#allocation4 + $0xb4] sm:$0xf]
        %v284 = vld [vmem:[#allocation4 + $0xb8] sm:$0xf]
        %v285 = vld [vmem:[#allocation4 + $0xbc] sm:$0xf]
        %v286 = vld [vmem:[#allocation4 + $0xc0] sm:$0xf]
        %v287 = vld [vmem:[#allocation4 + $0xc4] sm:$0xf]
        %v288 = vld [vmem:[#allocation4 + $0xc8] sm:$0xf]
        %v289 = vld [vmem:[#allocation4 + $0xcc] sm:$0xf]
        %v290 = vld [vmem:[#allocation4 + $0xd0] sm:$0xf]
        %v291 = vld [vmem:[#allocation4 + $0xd4] sm:$0xf]
        %v292 = vld [vmem:[#allocation4 + $0xd8] sm:$0xf]
        %v293 = vld [vmem:[#allocation4 + $0xdc] sm:$0xf]
        %v294 = vld [vmem:[#allocation4 + $0xe0] sm:$0xf]
        %v295 = vld [vmem:[#allocation4 + $0xe4] sm:$0xf]
        %v296 = vld [vmem:[#allocation4 + $0xe8] sm:$0xf]
        %v297 = vld [vmem:[#allocation4 + $0xec] sm:$0xf]
        %v298 = vld [vmem:[#allocation4 + $0xf0] sm:$0xf]
        %v299 = vld [vmem:[#allocation4 + $0xf4] sm:$0xf]
        %v300 = vld [vmem:[#allocation4 + $0xf8] sm:$0xf]
        %v301 = vld [vmem:[#allocation4 + $0xfc] sm:$0xf]
        %v302 = vld [vmem:[%s2] sm:$0x1]
        %v304 = vlaneseq
        %v305 = vshrl.u32 %v304, 7
        %v306 = vsub.s32 0, %v305
        %v307 = vrot.slane %v302, %v306
        %v313 = vunpack.c.l.b16 %v234
        %v314 = vunpack.c.h.b16 %v234
        %v315 = vunpack.c.l.b16 %v235
        %v316 = vunpack.c.h.b16 %v235
        %v317 = vunpack.c.l.b16 %v236
        %v318 = vunpack.c.h.b16 %v236
        %v319 = vunpack.c.l.b16 %v237
        %v320 = vunpack.c.h.b16 %v237
        %v321 = vpack.c.b16 %v317, %v313
        %v322 = vpack.c.b16 %v318, %v314
        %v323 = vpack.c.b16 %v319, %v315
        %v324 = vpack.c.b16 %v320, %v316
        %v393 = vunpack.c.l.b16 %v238
        %v394 = vunpack.c.l.b16 %v239
        %v395 = vunpack.c.l.b16 %v240
        %v396 = vunpack.c.l.b16 %v241
        %v397 = vunpack.c.l.b16 %v242
        %v398 = vunpack.c.l.b16 %v243
        %v399 = vunpack.c.l.b16 %v244
        %v400 = vunpack.c.l.b16 %v245
        %v401 = vunpack.c.l.b16 %v246
        %v402 = vunpack.c.l.b16 %v247
        %v403 = vunpack.c.l.b16 %v248
        %v404 = vunpack.c.l.b16 %v249
        %v405 = vunpack.c.l.b16 %v250
        %v406 = vunpack.c.l.b16 %v251
        %v407 = vunpack.c.l.b16 %v252
        %v408 = vunpack.c.l.b16 %v253
        %v409 = vunpack.c.l.b16 %v254
        %v410 = vunpack.c.l.b16 %v255
        %v411 = vunpack.c.l.b16 %v256
        %v412 = vunpack.c.l.b16 %v257
        %v413 = vunpack.c.l.b16 %v258
        %v414 = vunpack.c.l.b16 %v259
        %v415 = vunpack.c.l.b16 %v260
        %v416 = vunpack.c.l.b16 %v261
        %v417 = vunpack.c.l.b16 %v262
        %v418 = vunpack.c.l.b16 %v263
        %v419 = vunpack.c.l.b16 %v264
        %v420 = vunpack.c.l.b16 %v265
        %v421 = vunpack.c.l.b16 %v266
        %v422 = vunpack.c.l.b16 %v267
        %v423 = vunpack.c.l.b16 %v268
        %v424 = vunpack.c.l.b16 %v269
        %v425 = vunpack.c.l.b16 %v270
        %v426 = vunpack.c.l.b16 %v271
        %v427 = vunpack.c.l.b16 %v272
        %v428 = vunpack.c.l.b16 %v273
        %v429 = vunpack.c.l.b16 %v274
        %v430 = vunpack.c.l.b16 %v275
        %v431 = vunpack.c.l.b16 %v276
        %v432 = vunpack.c.l.b16 %v277
        %v433 = vunpack.c.l.b16 %v278
        %v434 = vunpack.c.l.b16 %v279
        %v435 = vunpack.c.l.b16 %v280
        %v436 = vunpack.c.l.b16 %v281
        %v437 = vunpack.c.l.b16 %v282
        %v438 = vunpack.c.l.b16 %v283
        %v439 = vunpack.c.l.b16 %v284
        %v440 = vunpack.c.l.b16 %v285
        %v441 = vunpack.c.l.b16 %v286
        %v442 = vunpack.c.l.b16 %v287
        %v443 = vunpack.c.l.b16 %v288
        %v444 = vunpack.c.l.b16 %v289
        %v445 = vunpack.c.l.b16 %v290
        %v446 = vunpack.c.l.b16 %v291
        %v447 = vunpack.c.l.b16 %v292
        %v448 = vunpack.c.l.b16 %v293
        %v449 = vunpack.c.l.b16 %v294
        %v450 = vunpack.c.l.b16 %v295
        %v451 = vunpack.c.l.b16 %v296
        %v452 = vunpack.c.l.b16 %v297
        %v453 = vunpack.c.l.b16 %v298
        %v454 = vunpack.c.l.b16 %v299
        %v455 = vunpack.c.l.b16 %v300
        %v456 = vunpack.c.l.b16 %v301
        %v457 = vpack.c.b16 %v394, %v393
        %v458 = vpack.c.b16 %v396, %v395
        %v459 = vpack.c.b16 %v398, %v397
        %v460 = vpack.c.b16 %v400, %v399
        %v461 = vpack.c.b16 %v402, %v401
        %v462 = vpack.c.b16 %v404, %v403
        %v463 = vpack.c.b16 %v406, %v405
        %v464 = vpack.c.b16 %v408, %v407
        %v465 = vpack.c.b16 %v410, %v409
        %v466 = vpack.c.b16 %v412, %v411
        %v467 = vpack.c.b16 %v414, %v413
        %v468 = vpack.c.b16 %v416, %v415
        %v469 = vpack.c.b16 %v418, %v417
        %v470 = vpack.c.b16 %v420, %v419
        %v471 = vpack.c.b16 %v422, %v421
        %v472 = vpack.c.b16 %v424, %v423
        %v473 = vpack.c.b16 %v426, %v425
        %v474 = vpack.c.b16 %v428, %v427
        %v475 = vpack.c.b16 %v430, %v429
        %v476 = vpack.c.b16 %v432, %v431
        %v477 = vpack.c.b16 %v434, %v433
        %v478 = vpack.c.b16 %v436, %v435
        %v479 = vpack.c.b16 %v438, %v437
        %v480 = vpack.c.b16 %v440, %v439
        %v481 = vpack.c.b16 %v442, %v441
        %v482 = vpack.c.b16 %v444, %v443
        %v483 = vpack.c.b16 %v446, %v445
        %v484 = vpack.c.b16 %v448, %v447
        %v485 = vpack.c.b16 %v450, %v449
        %v486 = vpack.c.b16 %v452, %v451
        %v487 = vpack.c.b16 %v454, %v453
        %v488 = vpack.c.b16 %v456, %v455
        %521 = vmatprep.subr.bf16.mxu0 0
        %522 = vmatpush1.bf16.msra.mxu0 %v464
        %523 = vmatprep.subr.bf16.mxu0 0
        %524 = vmatpush1.bf16.msra.mxu0 %v463
        %525 = vmatprep.subr.bf16.mxu0 0
        %526 = vmatpush1.bf16.msra.mxu0 %v462
        %527 = vmatprep.subr.bf16.mxu0 0
        %528 = vmatpush1.bf16.msra.mxu0 %v461
        %529 = vmatprep.subr.bf16.mxu0 0
        %530 = vmatpush1.bf16.msra.mxu0 %v460
        %531 = vmatprep.subr.bf16.mxu0 0
        %532 = vmatpush1.bf16.msra.mxu0 %v459
        %533 = vmatprep.subr.bf16.mxu0 0
        %534 = vmatpush1.bf16.msra.mxu0 %v458
        %535 = vmatprep.subr.bf16.mxu0 0
        %536 = vmatpush1.bf16.msra.mxu0 %v457
        %537 = vmatprep.subr.bf16.mxu0 0
        %538 = vmatpush2.bf16.msra.mxu0 %v472
        %539 = vmatprep.subr.bf16.mxu0 0
        %540 = vmatpush2.bf16.msra.mxu0 %v471
        %541 = vmatprep.subr.bf16.mxu0 0
        %542 = vmatpush2.bf16.msra.mxu0 %v470
        %543 = vmatprep.subr.bf16.mxu0 0
        %544 = vmatpush2.bf16.msra.mxu0 %v469
        %545 = vmatprep.subr.bf16.mxu0 0
        %546 = vmatpush2.bf16.msra.mxu0 %v468
        %547 = vmatprep.subr.bf16.mxu0 0
        %548 = vmatpush2.bf16.msra.mxu0 %v467
        %549 = vmatprep.subr.bf16.mxu0 0
        %550 = vmatpush2.bf16.msra.mxu0 %v466
        %551 = vmatprep.subr.bf16.mxu0 0
        %552 = vmatpush2.bf16.msra.mxu0 %v465
        %553 = vmatprep.mubr.bf16.mxu0 %v322
        %554 = vmatmul.mubr.bf16.gmra.mxu0 %v321
        %v555 = vpop.f32.mrf.mxu0
        %v556 = vadd.f32 %v307, %v555
        %v557 = vpop.f32.mrf.mxu0
        %v558 = vpop.f32.mrf.mxu0
        %v559 = vadd.f32 %v307, %v558
        %v560 = vpop.f32.mrf.mxu0
        %561 = vdwg.mxu0
        %562 = vmatprep.subr.bf16.mxu0 0
        %563 = vmatpush1.bf16.msra.mxu0 %v480
        %564 = vmatprep.subr.bf16.mxu0 0
        %565 = vmatpush1.bf16.msra.mxu0 %v479
        %566 = vmatprep.subr.bf16.mxu0 0
        %567 = vmatpush1.bf16.msra.mxu0 %v478
        %568 = vmatprep.subr.bf16.mxu0 0
        %569 = vmatpush1.bf16.msra.mxu0 %v477
        %570 = vmatprep.subr.bf16.mxu0 0
        %571 = vmatpush1.bf16.msra.mxu0 %v476
        %572 = vmatprep.subr.bf16.mxu0 0
        %573 = vmatpush1.bf16.msra.mxu0 %v475
        %574 = vmatprep.subr.bf16.mxu0 0
        %575 = vmatpush1.bf16.msra.mxu0 %v474
        %576 = vmatprep.subr.bf16.mxu0 0
        %577 = vmatpush1.bf16.msra.mxu0 %v473
        %578 = vmatprep.subr.bf16.mxu0 0
        %579 = vmatpush2.bf16.msra.mxu0 %v488
        %580 = vmatprep.subr.bf16.mxu0 0
        %581 = vmatpush2.bf16.msra.mxu0 %v487
        %582 = vmatprep.subr.bf16.mxu0 0
        %583 = vmatpush2.bf16.msra.mxu0 %v486
        %584 = vmatprep.subr.bf16.mxu0 0
        %585 = vmatpush2.bf16.msra.mxu0 %v485
        %586 = vmatprep.subr.bf16.mxu0 0
        %587 = vmatpush2.bf16.msra.mxu0 %v484
        %588 = vmatprep.subr.bf16.mxu0 0
        %589 = vmatpush2.bf16.msra.mxu0 %v483
        %590 = vmatprep.subr.bf16.mxu0 0
        %591 = vmatpush2.bf16.msra.mxu0 %v482
        %592 = vmatprep.subr.bf16.mxu0 0
        %593 = vmatpush2.bf16.msra.mxu0 %v481
        %594 = vmatprep.mubr.bf16.mxu0 %v324
        %595 = vmatmul.mubr.bf16.gmra.mxu0 %v323
        %v596 = vpop.f32.mrf.mxu0
        %v597 = vadd.f32 %v556, %v596
        %v598 = vpop.f32.mrf.mxu0
        %v599 = vpop.f32.mrf.mxu0
        %v600 = vadd.f32 %v559, %v599
        %v601 = vpop.f32.mrf.mxu0
        %602 = vdwg.mxu0
        %v603 = vtanh.pop %v597
        %v604 = vtanh.pop %v600
        %v605 = vld [vmem:[%s3] sm:$0x1]
        %v607 = vlaneseq
        %v608 = vshrl.u32 %v607, 7
        %v609 = vsub.s32 0, %v608
        %v610 = vrot.slane %v605, %v609
        %v612 = vmul.f32 %v603, %v610
        %v613 = vmul.f32 %v604, %v610
        %614 = vadd.xlane.f32.xlu0 %v612
        %v615 = vpop.xlane.xlu0 %614
        %616 = vadd.xlane.f32.xlu0 %v613
        %v617 = vpop.xlane.xlu0 %616
        %v618 = vmax.f32 %v615, %v617
        %v619 = vrot.slane %v618, 4
        %v620 = vmax.f32 %v618, %v619
        %v621 = vrot.slane %v620, 2
        %v622 = vmax.f32 %v620, %v621
        %v623 = vrot.slane %v622, 1
        %v624 = vmax.f32 %v622, %v623
        %v625 = vsub.f32 %v615, %v624
        %v626 = vsub.f32 %v617, %v624
        %v627 = vmul.f32 %v625, 1.442695
        %v628 = vpow.pop %v627
        %v629 = vmul.f32 %v626, 1.442695
        %v630 = vpow.pop %v629
        %v631 = vadd.f32 %v628, %v630
        %v632 = vrot.slane %v631, 4
        %v633 = vadd.f32 %v631, %v632
        %v634 = vrot.slane %v633, 2
        %v635 = vadd.f32 %v633, %v634
        %v636 = vrot.slane %v635, 1
        %v637 = vadd.f32 %v635, %v636
        %v638 = vrcp.pop %v637
        %v639 = vmul.f32 %v628, %v638
        %v640 = vmul.f32 %v630, %v638
        %vm641 = vcmask 7168
        %642 = vst.msk [vmem:[%s232] sm:$0xff] %vm641, %v639
        %643 = vst.msk [vmem:[%s232 + $0x8] sm:$0xff] %vm641, %v640
        %p644 = scmp.lt.s32.totalorder %s19, 3
        %s645 = scalar_select %p644, %s19, 3
        %s646 = smul.addr %s645, 2
        %s647 = smul.addr %s646, 8
        %s648 = scalar_lea.vmem %s4, %s647
        // Predicated region
        $region45: #{tpu_custom_call.1} parent=35 // pred_check
          %p649 = pneg %p126
        $region46: #{tpu_custom_call.1} parent=35 // pred_check_branch
          %651 = sbr.rel (%p649) target = $region48
        $region47: #{tpu_custom_call.1} parent=35 // pred_region
          _
        $region48: #{tpu_custom_call.1} parent=35 // pred_fallthru
          _
      $region36: #{tpu_custom_call.1} parent=5 // pred_fallthru
        _
      %p652 = scmp.le.s32.totalorder 2, %s14
      // Predicated region
      $region49: #{tpu_custom_call.1} parent=5 // pred_check
        %p653 = pneg %p652
      $region50: #{tpu_custom_call.1} parent=5 // pred_check_branch
        %655 = sbr.rel (%p653) target = $region52
      $region51: #{tpu_custom_call.1} parent=5 // pred_region
        %s656 = ssub.s32 %s14, 2
        // Predicated region
        $region53: #{tpu_custom_call.1} parent=51 // pred_check
          %p657 = pneg %p132
        $region54: #{tpu_custom_call.1} parent=51 // pred_check_branch
          %659 = sbr.rel (%p657) target = $region56
        $region55: #{tpu_custom_call.1} parent=51 // pred_region
          %p660 = scmp.lt.s32.totalorder %s20, 3
          %s661 = scalar_select %p660, %s20, 3
          %s662 = smul.addr %s661, 2
          %s663 = smul.addr %s662, 8
          %s664 = scalar_lea.vmem %s4, %s663
        $region56: #{tpu_custom_call.1} parent=51 // pred_fallthru
          _
      $region52: #{tpu_custom_call.1} parent=5 // pred_fallthru
        _
    $region6: #{tpu_custom_call.1} parent=1 // loop_footer
      %s18 = sadd.s32 1, %s14
    $region7: #{tpu_custom_call.1} parent=1 // loop_footer_branch
      %13 = sbr.rel target = $region3
    $region8: #{tpu_custom_call.1} parent=1 // loop_exit
      _
    %665 = vsyncpa [#allocation3], 1
    %s666 = scalar_lea.sflag [#allocation3], 1
    %667 = vsyncpa %s666, 1
    %668 = vsyncpa [#allocation5], 1

</llo_original>
